<compile_context>
chip_gen: v5e
topology: v5e:2x2
jax: 0.10.0
libtpu: 0.0.40
codegen_flags: <defaults>
</compile_context>

<pallas_src>
import functools

import jax
import jax.numpy as jnp
from jax.experimental import pallas as pl
from jax.experimental.pallas import tpu as pltpu


def _option_a_kernel(x_ref, sel_ref, o_ref, *, c_in, pad, hw_out):
    """Lane-dense option-A shortcut for one batch tile.

    x_ref:   (Bt, C_in,  H*W)          flattened-spatial NCHW input tile
    sel_ref: (H*W, H_out*W_out)        0/1 one-hot selection matrix (resident)
    o_ref:   (Bt, C_out, H_out*W_out)  C_out = C_in + 2*pad
    """
    bt = x_ref.shape[0]
    hw = x_ref.shape[2]

    # Combined H & W stride-2 subsampling as a single one-hot selection matmul.
    # Exact for float inputs: sel is 0/1 and each output column has exactly one
    # nonzero, so the f32 accumulate introduces no rounding.
    # TODO(synk): integer activations (e.g. int8) would need a non-MXU path on
    # v7x (no integer MXU); only float dtypes are supported here.
    x2 = x_ref[...].reshape(bt * c_in, hw)
    sub = jnp.dot(x2, sel_ref[...], preferred_element_type=jnp.float32)
    sub = sub.astype(o_ref.dtype).reshape(bt, c_in, hw_out)

    # Channel zero padding via disjoint slab stores (channel = sublane axis).
    if pad > 0:
        zeros = jnp.zeros((bt, pad, hw_out), dtype=o_ref.dtype)
        o_ref[:, :pad, :] = zeros
        o_ref[:, pad + c_in:, :] = zeros
    o_ref[:, pad:pad + c_in, :] = sub


def option_a_shortcut(x_nchw, pad, *, target_block_bytes=512 * 1024):
    """fn(x) = zero-pad channels of x[:, :, ::2, ::2]; NCHW in, NCHW out."""
    n, c, h, w = x_nchw.shape
    h_out, w_out = pl.cdiv(h, 2), pl.cdiv(w, 2)   # ceil: matches PyTorch ::2
    c_out = c + 2 * pad
    hw, hw_out = h * w, h_out * w_out
    dtype = x_nchw.dtype
    itemsize = x_nchw.dtype.itemsize

    # Lane-dense view: flatten spatial dims onto the 128-lane axis.  These
    # reshapes are free on contiguous NCHW arrays.
    x2d = x_nchw.reshape(n, c, hw)

    # One-hot selection matrix mapping flat (h, w) -> flat (h // 2, w // 2).
    q = jnp.arange(hw_out, dtype=jnp.int32)
    src = 2 * (q // w_out) * w + 2 * (q % w_out)
    sel = (jnp.arange(hw, dtype=jnp.int32)[:, None] == src[None, :]).astype(dtype)

    # Batch-tile so each pipelined block is ~target_block_bytes (amortizes the
    # per-grid-step overhead), while keeping >=2 grid steps when n >= 2 so both
    # v7x TensorCores get work.  Blocks stay a few MiB at most -> fits easily
    # inside v7x's 64 MiB VMEM (and v5e/v6e's 128 MiB) even double-buffered.
    per_image_bytes = (c * hw + c_out * hw_out) * itemsize
    bt = max(1, target_block_bytes // per_image_bytes)
    if n >= 2:
        bt = min(bt, pl.cdiv(n, 2))
    bt = min(bt, n)
    grid = (pl.cdiv(n, bt),)

    bytes_accessed = (n * c * hw + n * c_out * hw_out + hw * hw_out) * itemsize

    kernel = functools.partial(_option_a_kernel, c_in=c, pad=pad, hw_out=hw_out)

    out2d = pl.pallas_call(
        kernel,
        out_shape=jax.ShapeDtypeStruct((n, c_out, hw_out), dtype),
        grid=grid,
        in_specs=[
            pl.BlockSpec((bt, c, hw), lambda i: (i, 0, 0)),
            # Constant block index -> sel stays resident in VMEM, one DMA total.
            pl.BlockSpec((hw, hw_out), lambda i: (0, 0)),
        ],
        out_specs=pl.BlockSpec((bt, c_out, hw_out), lambda i: (i, 0, 0)),
        compiler_params=pltpu.CompilerParams(
            dimension_semantics=("parallel",),
            vmem_limit_bytes=32 * 1024 * 1024,
        ),
        cost_estimate=pl.CostEstimate(
            flops=0, transcendentals=0, bytes_accessed=bytes_accessed),
    )(x2d, sel)

    return out2d.reshape(n, c_out, h_out, w_out)


class LambdaLayer:
    """JAX port of the torch LambdaLayer: forward(x) = fn(x)."""

    # TODO(synk): an arbitrary user `fn` cannot be a single generic Pallas
    # kernel; only the canonical option-A shortcut fn is kernelized here.
    def __init__(self, fn):
        self.fn = fn

    def __call__(self, x):
        return self.fn(x)


if __name__ == "__main__":
    key = jax.random.PRNGKey(0)
    # NCHW input, matching the PyTorch module's convention.
    x = jax.random.normal(key, (2, 4, 16, 16), dtype=jnp.float32)

    PAD = 2  # planes // 4 for planes = 8 in the canonical ResNet option-A lambda.
    layer = LambdaLayer(lambda t: option_a_shortcut(t, PAD))

    out = jax.block_until_ready(layer(x))

    # Pure-JAX reference of the same fn.
    ref = jnp.pad(x[:, :, ::2, ::2], ((0, 0), (PAD, PAD), (0, 0), (0, 0)))

    assert out.shape == (2, 8, 8, 8), out.shape
    assert out.dtype == x.dtype
    assert jnp.allclose(out, ref), "Pallas output does not match reference"

    print("KERNEL_OK")
</pallas_src>

<mosaic_0001>
module attributes {stable_mosaic.version = 11 : i64} {
  func.func @_option_a_kernel(%arg0: i32, %arg1: memref<1x4x256xf32, #tpu.memory_space<vmem>>, %arg2: memref<256x64xf32, #tpu.memory_space<vmem>>, %arg3: memref<1x8x64xf32, #tpu.memory_space<vmem>>) attributes {dimension_semantics = [#tpu.dimension_semantics<parallel>], iteration_bounds = array<i64: 2>, scalar_prefetch = 0 : i64, scratch_operands = 0 : i64, tpu.core_type = #tpu.core_type<tc>, window_params = [{transform_indices = @transform_0, window_bounds = array<i64: 1, 4, 256>}, {pipeline_mode = #tpu.pipeline_mode<synchronous>, transform_indices = @transform_1, window_bounds = array<i64: 256, 64>}, {transform_indices = @transform_2, window_bounds = array<i64: 1, 8, 64>}]} {
    %c0 = arith.constant 0 : index
    %c0_0 = arith.constant 0 : index
    %c0_1 = arith.constant 0 : index
    %0 = vector.load %arg1[%c0, %c0_0, %c0_1] : memref<1x4x256xf32, #tpu.memory_space<vmem>>, vector<1x4x256xf32>
    %1 = vector.shape_cast %0 : vector<1x4x256xf32> to vector<4x256xf32>
    %c0_2 = arith.constant 0 : index
    %c0_3 = arith.constant 0 : index
    %2 = vector.load %arg2[%c0_2, %c0_3] : memref<256x64xf32, #tpu.memory_space<vmem>>, vector<256x64xf32>
    %cst = arith.constant dense<0.000000e+00> : vector<4x64xf32>
    %3 = tpu.matmul %1, %2, %cst {dimension_numbers = #tpu.dot_dimension_numbers<[1], [0], [0], [1], [0, 0, 1, 1], [], []>} : vector<4x256xf32>, vector<256x64xf32>, vector<4x64xf32> -> vector<4x64xf32>
    %4 = vector.shape_cast %3 : vector<4x64xf32> to vector<1x4x64xf32>
    %cst_4 = arith.constant 0.000000e+00 : f32
    %5 = vector.broadcast %cst_4 : f32 to vector<1x2x64xf32>
    %c0_5 = arith.constant 0 : index
    %c0_6 = arith.constant 0 : index
    %c0_7 = arith.constant 0 : index
    %6 = vector.load %arg3[%c0_5, %c0_6, %c0_7] : memref<1x8x64xf32, #tpu.memory_space<vmem>>, vector<1x2x64xf32>
    tpu.vector_store %arg3[%c0_5, %c0_6, %c0_7], %5 {strides = array<i32>} : memref<1x8x64xf32, #tpu.memory_space<vmem>>, vector<1x2x64xf32>,
    %c0_8 = arith.constant 0 : index
    %c6 = arith.constant 6 : index
    %c0_9 = arith.constant 0 : index
    %7 = vector.load %arg3[%c0_8, %c6, %c0_9] : memref<1x8x64xf32, #tpu.memory_space<vmem>>, vector<1x2x64xf32>
    tpu.vector_store %arg3[%c0_8, %c6, %c0_9], %5 {strides = array<i32>} : memref<1x8x64xf32, #tpu.memory_space<vmem>>, vector<1x2x64xf32>,
    %c0_10 = arith.constant 0 : index
    %c2 = arith.constant 2 : index
    %c0_11 = arith.constant 0 : index
    %8 = vector.load %arg3[%c0_10, %c2, %c0_11] : memref<1x8x64xf32, #tpu.memory_space<vmem>>, vector<1x4x64xf32>
    tpu.vector_store %arg3[%c0_10, %c2, %c0_11], %4 {strides = array<i32>} : memref<1x8x64xf32, #tpu.memory_space<vmem>>, vector<1x4x64xf32>,
    return
  }
  func.func @transform_0(%arg0: i32) -> (i32, i32, i32) {
    %c0_i32 = arith.constant 0 : i32
    %c0_i32_0 = arith.constant 0 : i32
    %c0_i32_1 = arith.constant 0 : i32
    return %arg0, %c0_i32, %c0_i32_0 : i32, i32, i32
  }
  func.func @transform_1(%arg0: i32) -> (i32, i32) {
    %c0_i32 = arith.constant 0 : i32
    %c0_i32_0 = arith.constant 0 : i32
    %c0_i32_1 = arith.constant 0 : i32
    return %c0_i32, %c0_i32_0 : i32, i32
  }
  func.func @transform_2(%arg0: i32) -> (i32, i32, i32) {
    %c0_i32 = arith.constant 0 : i32
    %c0_i32_0 = arith.constant 0 : i32
    %c0_i32_1 = arith.constant 0 : i32
    return %arg0, %c0_i32, %c0_i32_0 : i32, i32, i32
  }
}

</mosaic_0001>

<llo_original>
// kernel: tpu_custom_call.1
$region0: #{tpu_custom_call.1}
  #allocation0 [shape = 'u32[]', space=smem, size = 0x4, offset = 0x4, fixed_abs, tag = 'smem constant byte address 0x4 - core index']
  #allocation1 [shape = 'u32[72,128]{1,0:T(1,128)}', space=vmem, size = 0x9000, scoped, tag = 'internal scratch']
  %s0 = inlined_call_operand.vmem [shape: f32[2,4,256], index: 0, kind: input, shape index: {}]
  %s1 = inlined_call_operand.vmem [shape: f32[256,64], index: 1, kind: input, shape index: {}]
  %s2 = inlined_call_operand.hbm [shape: f32[2,8,64], index: 2, kind: output, shape index: {}]
  %s3 = sld [smem:[#allocation0]]
  $region41: #{tpu_custom_call.1} parent=0
    _
  %s5 = ssub.s32 1, %s3
  %s6 = scalar_select 0, %s5, %s3
  $region1: #{tpu_custom_call.1} parent=0
    #allocation2 [shape = 'u8[8192]{0}', space=vmem, size = 0x2000, scoped, tag = 'output window, operand 0']
    #allocation3 [shape = 's32[2]{0}', space=sflag, size = 0x8, scoped, tag = 'scoped memory for tpu_custom_call.1']
    %7 = vsyncpa [#allocation3], 0
    %s8 = scalar_lea.sflag [#allocation3], 1
    %9 = vsyncpa %s8, 0
    loop: start=0, step=1, limit=4
    $region2: #{tpu_custom_call.1} parent=1 // loop_pre_header
      _
    $region3: #{tpu_custom_call.1} parent=1 // loop_header
      %s11 = sphi 0, %s15
      %p12 = scmp.ge.s32.totalorder %s11, 4
      %s21 = sphi 0, %s23
      %s24 = sphi 0, %s21
      %s25 = sphi 0, %s24
      %s41 = sphi 0, %s25
      %s45 = sphi 0, %s45
      %s47 = sphi 0, %s45
      %s48 = sphi 0, %s47
      %s62 = sphi 0, %s48
      %s68 = sphi 0, %s70
      %s71 = sphi 0, %s68
      %s72 = sphi 0, %s71
      %s88 = sphi 0, %s72
    $region4: #{tpu_custom_call.1} parent=1 // loop_header_branch
      %14 = sbr.rel (%p12) target = $region8
    $region5: #{tpu_custom_call.1} parent=1 // loop_body
      %s16 = ssub.s32 %s11, 1
      %s17 = ssub.s32 %s11, 2
      %s18 = sadd.s32 %s11, 1
      %s19 = ssub.s32 %s11, %s18
      %p20 = scmp.eq.s32.totalorder %s19, 0
      %s22 = sadd.s32 %s21, 1
      %s23 = scalar_select %p20, %s21, %s22
      %p26 = pneg %p20
      %p27 = scmp.eq.s32.totalorder %s11, 1
      %p28 = por %p26, %p27
      %p29 = scmp.ne.s32.totalorder %s21, %s24
      %p30 = scmp.eq.s32.totalorder %s11, 0
      %p31 = por %p29, %p30
      %p32 = scmp.ne.s32.totalorder %s21, %s24
      %p33 = scmp.eq.s32.totalorder %s16, 1
      %p34 = por %p32, %p33
      %p35 = scmp.ne.s32.totalorder %s24, %s25
      %p36 = scmp.eq.s32.totalorder %s16, 0
      %p37 = por %p35, %p36
      %p38 = scmp.ne.s32.totalorder %s24, %s25
      %p39 = scmp.eq.s32.totalorder %s17, 1
      %p40 = por %p38, %p39
      %p42 = scmp.ne.s32.totalorder %s25, %s41
      %p43 = scmp.eq.s32.totalorder %s17, 0
      %p44 = por %p42, %p43
      %s46 = sadd.s32 %s45, 1
      %p49 = scmp.eq.s32.totalorder %s11, 1
      %p50 = scmp.ne.s32.totalorder %s45, %s47
      %p51 = scmp.eq.s32.totalorder %s11, 0
      %p52 = por %p50, %p51
      %p53 = scmp.ne.s32.totalorder %s45, %s47
      %p54 = scmp.eq.s32.totalorder %s16, 1
      %p55 = por %p53, %p54
      %p56 = scmp.ne.s32.totalorder %s47, %s48
      %p57 = scmp.eq.s32.totalorder %s16, 0
      %p58 = por %p56, %p57
      %p59 = scmp.ne.s32.totalorder %s47, %s48
      %p60 = scmp.eq.s32.totalorder %s17, 1
      %p61 = por %p59, %p60
      %p63 = scmp.ne.s32.totalorder %s48, %s62
      %p64 = scmp.eq.s32.totalorder %s17, 0
      %p65 = por %p63, %p64
      %s66 = ssub.s32 %s11, %s18
      %p67 = scmp.eq.s32.totalorder %s66, 0
      %s69 = sadd.s32 %s68, 1
      %s70 = scalar_select %p67, %s68, %s69
      %p73 = pneg %p67
      %p74 = scmp.eq.s32.totalorder %s11, 1
      %p75 = por %p73, %p74
      %p76 = scmp.ne.s32.totalorder %s68, %s71
      %p77 = scmp.eq.s32.totalorder %s11, 0
      %p78 = por %p76, %p77
      %p79 = scmp.ne.s32.totalorder %s68, %s71
      %p80 = scmp.eq.s32.totalorder %s16, 1
      %p81 = por %p79, %p80
      %p82 = scmp.ne.s32.totalorder %s71, %s72
      %p83 = scmp.eq.s32.totalorder %s16, 0
      %p84 = por %p82, %p83
      %p85 = scmp.ne.s32.totalorder %s71, %s72
      %p86 = scmp.eq.s32.totalorder %s17, 1
      %p87 = por %p85, %p86
      %p89 = scmp.ne.s32.totalorder %s72, %s88
      %p90 = scmp.eq.s32.totalorder %s17, 0
      %p91 = por %p89, %p90
      %p92 = scmp.le.s32.totalorder 1, %s11
      %p93 = scmp.lt.s32.totalorder %s11, 3
      %p94 = pnand %p92, %p93
      %p95 = pneg %p94
      // Predicated region
      $region9: #{tpu_custom_call.1} parent=5 // pred_check
        _
      $region10: #{tpu_custom_call.1} parent=5 // pred_check_branch
        %97 = sbr.rel (%p94) target = $region12
      $region11: #{tpu_custom_call.1} parent=5 // pred_region
        %s98 = ssub.s32 %s11, 1
        // Predicated region
        $region13: #{tpu_custom_call.1} parent=11 // pred_check
          %p99 = pneg %p58
        $region14: #{tpu_custom_call.1} parent=11 // pred_check_branch
          %101 = sbr.rel (%p99) target = $region16
        $region15: #{tpu_custom_call.1} parent=11 // pred_region
          _
        $region16: #{tpu_custom_call.1} parent=11 // pred_fallthru
          _
      $region12: #{tpu_custom_call.1} parent=5 // pred_fallthru
        _
      %p102 = scmp.lt.s32.totalorder %s11, 2
      // Predicated region
      $region17: #{tpu_custom_call.1} parent=5 // pred_check
        %p103 = pneg %p102
      $region18: #{tpu_custom_call.1} parent=5 // pred_check_branch
        %105 = sbr.rel (%p103) target = $region20
      $region19: #{tpu_custom_call.1} parent=5 // pred_region
        // Predicated region
        $region21: #{tpu_custom_call.1} parent=19 // pred_check
          %p106 = pneg %p31
        $region22: #{tpu_custom_call.1} parent=19 // pred_check_branch
          %108 = sbr.rel (%p106) target = $region24
        $region23: #{tpu_custom_call.1} parent=19 // pred_region
          %p109 = scmp.lt.s32.totalorder %s11, 1
          %s110 = scalar_select %p109, %s11, 1
          %s111 = smul.addr %s110, 2
          %s112 = smul.addr %s111, 4
          %s113 = scalar_lea.vmem %s0, %s112
        $region24: #{tpu_custom_call.1} parent=19 // pred_fallthru
          _
      $region20: #{tpu_custom_call.1} parent=5 // pred_fallthru
        _
      %p114 = scmp.le.s32.totalorder 1, %s11
      %p115 = scmp.lt.s32.totalorder %s11, 3
      %p116 = pnand %p114, %p115
      %p117 = pneg %p116
      // Predicated region
      $region25: #{tpu_custom_call.1} parent=5 // pred_check
        _
      $region26: #{tpu_custom_call.1} parent=5 // pred_check_branch
        %119 = sbr.rel (%p116) target = $region28
      $region27: #{tpu_custom_call.1} parent=5 // pred_region
        %s120 = ssub.s32 %s11, 1
        %p121 = scmp.lt.s32.totalorder %s16, 1
        %s122 = scalar_select %p121, %s16, 1
        %s123 = smul.addr %s122, 2
        %s124 = smul.addr %s123, 4
        %s125 = scalar_lea.vmem %s0, %s124
        %p126 = pneg %p37
        %p127 = pneg %p34
        %p128 = pneg %p58
        %p129 = pneg %p55
        %p130 = pneg %p84
        %p131 = pneg %p81
        %s132 = sand.u32 %s71, 1
        %s133 = scalar_lea.sflag [#allocation3], %s132
        %s134 = sand.u32 %s71, 1
        %s135 = smul.addr %s134, 8
        %s136 = scalar_lea.vmem [#allocation2], %s135
        %p137 = scmp.lt.s32.totalorder %s16, 1
        %s138 = scalar_select %p137, %s16, 1
        %s139 = smul.addr %s138, 2
        %s140 = smul.addr %s139, 4
        %s141 = scalar_lea.vmem %s0, %s140
        %v142 = vld [vmem:[%s141] sm:$0xff]
        %v143 = vld [vmem:[%s1] sm:$0xff]
        %v144 = vld [vmem:[%s1 + $0x8] sm:$0xff]
        %v145 = vld [vmem:[%s1 + $0x10] sm:$0xff]
        %v146 = vld [vmem:[%s1 + $0x18] sm:$0xff]
        %v147 = vld [vmem:[%s1 + $0x20] sm:$0xff]
        %v148 = vld [vmem:[%s1 + $0x28] sm:$0xff]
        %v149 = vld [vmem:[%s1 + $0x30] sm:$0xff]
        %v150 = vld [vmem:[%s1 + $0x38] sm:$0xff]
        %v151 = vld [vmem:[%s1 + $0x40] sm:$0xff]
        %v152 = vld [vmem:[%s1 + $0x48] sm:$0xff]
        %v153 = vld [vmem:[%s1 + $0x50] sm:$0xff]
        %v154 = vld [vmem:[%s1 + $0x58] sm:$0xff]
        %v155 = vld [vmem:[%s1 + $0x60] sm:$0xff]
        %v156 = vld [vmem:[%s1 + $0x68] sm:$0xff]
        %v157 = vld [vmem:[%s1 + $0x70] sm:$0xff]
        %v158 = vld [vmem:[%s1 + $0x78] sm:$0xff]
        %v159 = vld [vmem:[%s1 + $0x80] sm:$0xff]
        %v160 = vld [vmem:[%s1 + $0x88] sm:$0xff]
        %v161 = vld [vmem:[%s1 + $0x90] sm:$0xff]
        %v162 = vld [vmem:[%s1 + $0x98] sm:$0xff]
        %v163 = vld [vmem:[%s1 + $0xa0] sm:$0xff]
        %v164 = vld [vmem:[%s1 + $0xa8] sm:$0xff]
        %v165 = vld [vmem:[%s1 + $0xb0] sm:$0xff]
        %v166 = vld [vmem:[%s1 + $0xb8] sm:$0xff]
        %v167 = vld [vmem:[%s1 + $0xc0] sm:$0xff]
        %v168 = vld [vmem:[%s1 + $0xc8] sm:$0xff]
        %v169 = vld [vmem:[%s1 + $0xd0] sm:$0xff]
        %v170 = vld [vmem:[%s1 + $0xd8] sm:$0xff]
        %v171 = vld [vmem:[%s1 + $0xe0] sm:$0xff]
        %v172 = vld [vmem:[%s1 + $0xe8] sm:$0xff]
        %v173 = vld [vmem:[%s1 + $0xf0] sm:$0xff]
        %v174 = vld [vmem:[%s1 + $0xf8] sm:$0xff]
        %176 = vst [vmem:[#allocation1] ss:$2 sm:$0xff] %v142
        %v177 = vld.sshfl [vmem:[#allocation1] sm:$0xff pattern:$0x75316420]
        %v178 = vld.sshfl [vmem:[#allocation1 + $0x8] sm:$0xff pattern:$0x75316420]
        %181 = vmatpush.msra.mxu0 %v158
        %182 = vmatpush.msra.mxu0 %v157
        %183 = vmatpush.msra.mxu0 %v156
        %184 = vmatpush.msra.mxu0 %v155
        %185 = vmatpush.msra.mxu0 %v154
        %186 = vmatpush.msra.mxu0 %v153
        %187 = vmatpush.msra.mxu0 %v152
        %188 = vmatpush.msra.mxu0 %v151
        %189 = vmatpush.msra.mxu0 %v150
        %190 = vmatpush.msra.mxu0 %v149
        %191 = vmatpush.msra.mxu0 %v148
        %192 = vmatpush.msra.mxu0 %v147
        %193 = vmatpush.msra.mxu0 %v146
        %194 = vmatpush.msra.mxu0 %v145
        %195 = vmatpush.msra.mxu0 %v144
        %196 = vmatpush.msra.mxu0 %v143
        %197 = vmatmul.f32.gmra.mxu0 %v177
        %v198 = vpop.f32.mrf.mxu0
        %v199 = vadd.f32 0.0, %v198
        %200 = vdwg.mxu0
        %201 = vmatpush.msra.mxu0 %v174
        %202 = vmatpush.msra.mxu0 %v173
        %203 = vmatpush.msra.mxu0 %v172
        %204 = vmatpush.msra.mxu0 %v171
        %205 = vmatpush.msra.mxu0 %v170
        %206 = vmatpush.msra.mxu0 %v169
        %207 = vmatpush.msra.mxu0 %v168
        %208 = vmatpush.msra.mxu0 %v167
        %209 = vmatpush.msra.mxu0 %v166
        %210 = vmatpush.msra.mxu0 %v165
        %211 = vmatpush.msra.mxu0 %v164
        %212 = vmatpush.msra.mxu0 %v163
        %213 = vmatpush.msra.mxu0 %v162
        %214 = vmatpush.msra.mxu0 %v161
        %215 = vmatpush.msra.mxu0 %v160
        %216 = vmatpush.msra.mxu0 %v159
        %217 = vmatmul.f32.gmra.mxu0 %v178
        %v218 = vpop.f32.mrf.mxu0
        %v219 = vadd.f32 %v199, %v218
        %220 = vdwg.mxu0
        %vm221 = vcmask 517120
        %222 = vst.msk [vmem:[%s136] sm:$0x3] %vm221, 0.0
        %223 = vst.msk [vmem:[%s136 + $0x6] sm:$0x3] %vm221, 0.0
        %vm224 = vcmask 519168
        %225 = vst.msk [vmem:[%s136 + $0x2] sm:$0xf] %vm224, %v219
        %s226 = sand.u32 %s71, 1
        %s227 = scalar_lea.sflag [#allocation3], %s226
        %s228 = sand.u32 %s71, 1
        %s229 = smul.addr %s228, 8
        %s230 = scalar_lea.vmem [#allocation2], %s229
        // Predicated region
        $region29: #{tpu_custom_call.1} parent=27 // pred_check
          %p231 = pneg %p81
        $region30: #{tpu_custom_call.1} parent=27 // pred_check_branch
          %233 = sbr.rel (%p231) target = $region32
        $region31: #{tpu_custom_call.1} parent=27 // pred_region
          %235 = vsyncadd %s227, 0
          %s236 = smul.addr %s16, 8
          %s237 = scalar_lea.hbm %s2, %s236
          %s239 = sshll.u32 %s230, 4
          %s240 = int_to_ptr.vmem [resolvable:$true] %s239
          %s241 = sshll.u32 %s237, 4
          %s242 = int_to_ptr.hbm [resolvable:$true] %s241
          %244 = dma.vmem_to_hbm [thread:$0]  %s240, 128, %s242, %s227
        $region32: #{tpu_custom_call.1} parent=27 // pred_fallthru
          _
      $region28: #{tpu_custom_call.1} parent=5 // pred_fallthru
        _
      %p245 = scmp.le.s32.totalorder 2, %s11
      // Predicated region
      $region33: #{tpu_custom_call.1} parent=5 // pred_check
        %p246 = pneg %p245
      $region34: #{tpu_custom_call.1} parent=5 // pred_check_branch
        %248 = sbr.rel (%p246) target = $region36
      $region35: #{tpu_custom_call.1} parent=5 // pred_region
        %s249 = ssub.s32 %s11, 2
        // Predicated region
        $region37: #{tpu_custom_call.1} parent=35 // pred_check
          %p250 = pneg %p87
        $region38: #{tpu_custom_call.1} parent=35 // pred_check_branch
          %252 = sbr.rel (%p250) target = $region40
        $region39: #{tpu_custom_call.1} parent=35 // pred_region
          %s253 = sand.u32 %s72, 1
          %s254 = scalar_lea.sflag [#allocation3], %s253
          %s255 = sand.u32 %s72, 1
          %s256 = smul.addr %s255, 8
          %s257 = scalar_lea.vmem [#allocation2], %s256
          %259 = dma.done %s254, 128
        $region40: #{tpu_custom_call.1} parent=35 // pred_fallthru
          _
      $region36: #{tpu_custom_call.1} parent=5 // pred_fallthru
        _
    $region6: #{tpu_custom_call.1} parent=1 // loop_footer
      %s15 = sadd.s32 1, %s11
    $region7: #{tpu_custom_call.1} parent=1 // loop_footer_branch
      %10 = sbr.rel target = $region3
    $region8: #{tpu_custom_call.1} parent=1 // loop_exit
      _
    %260 = vsyncpa [#allocation3], 1
    %s261 = scalar_lea.sflag [#allocation3], 1
    %262 = vsyncpa %s261, 1

</llo_original>
